<compile_context>
chip_gen: v6e
topology: v6e:2x2x1
jax: 0.10.0
libtpu: 0.0.40
codegen_flags: <defaults>
</compile_context>

<pallas_src>
import jax
import jax.numpy as jnp
from jax import lax
from jax.experimental import pallas as pl
from jax.experimental.pallas import tpu as pltpu

_MAX_TILE = 64 * 1024  # lanes per grid step; 3 * 64K * 4 B = 768 KiB per block


def _round_up(x, m):
    return ((x + m - 1) // m) * m


def stress_kernel(sp_ref, strain_ref, out_ref):
    # sp_ref:     SMEM (2,)        -> precomputed softplus(C1), softplus(C2)
    # strain_ref: VMEM (3, TILE_N) -> component-major strain tile
    # out_ref:    VMEM (3, TILE_N) -> component-major dW/dstrain tile
    sp1 = sp_ref[0]
    sp2 = sp_ref[1]

    e0 = strain_ref[0:1, :]
    e1 = strain_ref[1:2, :]
    e2 = strain_ref[2:3, :]

    a = 2.0 * e0 + 1.0
    b = 2.0 * e1 + 1.0
    det = a * b - e2 * e2          # det(C) = J^2

    inv_j = lax.rsqrt(det)         # single transcendental per element
    j = det * inv_j                # J = det / sqrt(det)

    # t = (dW/dJ) / J
    t = (sp2 * (j - 1.0) - sp1 * inv_j) * inv_j

    out_ref[0:1, :] = sp1 + t * b
    out_ref[1:2, :] = sp1 + t * a
    out_ref[2:3, :] = -t * e2


@jax.jit
def stress_predictor_forward(strain, c1, c2):
    """strain: (B, T, 3) -> (B, T, 3) = dW/dstrain, matching StressPredictor.forward."""
    B, T, _ = strain.shape
    n = B * T
    tile = min(_MAX_TILE, _round_up(n, 128))
    n_pad = _round_up(n, tile)

    # Hoist the two scalar softplus evaluations out of the kernel.
    sp = jnp.stack([jax.nn.softplus(c1), jax.nn.softplus(c2)]).astype(jnp.float32)

    # Component-major (3, N), lane-dense, padded to a multiple of the tile.
    s2 = jnp.transpose(strain.reshape(n, 3).astype(jnp.float32), (1, 0))
    # Zero-padded lanes give a = b = 1, c = 0 -> det = 1, so no NaNs; sliced off below.
    s2 = jnp.pad(s2, ((0, 0), (0, n_pad - n)))

    out = pl.pallas_call(
        stress_kernel,
        out_shape=jax.ShapeDtypeStruct((3, n_pad), jnp.float32),
        grid=(n_pad // tile,),
        in_specs=[
            pl.BlockSpec(memory_space=pltpu.MemorySpace.SMEM),   # softplus params
            pl.BlockSpec((3, tile), lambda i: (0, i)),           # strain tile
        ],
        out_specs=pl.BlockSpec((3, tile), lambda i: (0, i)),
        input_output_aliases={1: 0},  # reuse strain HBM buffer for the output
        compiler_params=pltpu.CompilerParams(
            dimension_semantics=("parallel",),
        ),
    )(sp, s2)

    return jnp.transpose(out[:, :n], (1, 0)).reshape(B, T, 3)


def _reference_grad(strain, c1, c2):
    """Pure-JAX reference: autodiff of W, mirroring the PyTorch module."""
    def W_sum(s):
        e0, e1, e2 = s[..., 0], s[..., 1], s[..., 2]
        a = 2.0 * e0 + 1.0
        b = 2.0 * e1 + 1.0
        J = jnp.sqrt(a * b - e2 * e2)
        I1 = e0 + e1
        sp1 = jax.nn.softplus(c1)
        sp2 = jax.nn.softplus(c2)
        W = sp1 * I1 - sp1 * jnp.log(J) + 0.5 * sp2 * (J - 1.0) ** 2
        return jnp.sum(W)  # grad_outputs = ones
    return jax.grad(W_sum)(strain)


if __name__ == "__main__":
    key = jax.random.PRNGKey(0)
    B, T = 2, 8  # batches, time steps; last dim is the 3 strain components

    # Small strains keep det(C) > 0, as physically required.
    strain = 0.1 * jax.random.normal(key, (B, T, 3), dtype=jnp.float32)

    # Deterministic parameter init, matching nn.Parameter(torch.tensor(1e6)).
    C1 = jnp.float32(1000000.0)
    C2 = jnp.float32(1000000.0)

    stress = stress_predictor_forward(strain, C1, C2)
    stress = jax.block_until_ready(stress)

    ref = _reference_grad(strain, C1, C2)
    assert stress.shape == (B, T, 3)
    assert jnp.allclose(stress, ref, rtol=1e-4, atol=1e-2), (stress, ref)

    print("KERNEL_OK")
</pallas_src>

<mosaic_0001>
module attributes {stable_mosaic.version = 11 : i64} {
  func.func @stress_kernel(%arg0: i32, %arg1: memref<2xf32, #tpu.memory_space<smem>>, %arg2: memref<3x128xf32, #tpu.memory_space<vmem>>, %arg3: memref<3x128xf32, #tpu.memory_space<vmem>>) attributes {dimension_semantics = [#tpu.dimension_semantics<parallel>], iteration_bounds = array<i64: 1>, scalar_prefetch = 0 : i64, scratch_operands = 0 : i64, tpu.core_type = #tpu.core_type<tc>, window_params = [{transform_indices = @transform_0, window_bounds = array<i64: 2>}, {transform_indices = @transform_1, window_bounds = array<i64: 3, 128>}, {transform_indices = @transform_2, window_bounds = array<i64: 3, 128>}]} {
    %c0 = arith.constant 0 : index
    %0 = memref.load %arg1[%c0] : memref<2xf32, #tpu.memory_space<smem>>
    %c1 = arith.constant 1 : index
    %1 = memref.load %arg1[%c1] : memref<2xf32, #tpu.memory_space<smem>>
    %c0_0 = arith.constant 0 : index
    %c0_1 = arith.constant 0 : index
    %2 = vector.load %arg2[%c0_0, %c0_1] : memref<3x128xf32, #tpu.memory_space<vmem>>, vector<1x128xf32>
    %c1_2 = arith.constant 1 : index
    %c0_3 = arith.constant 0 : index
    %3 = vector.load %arg2[%c1_2, %c0_3] : memref<3x128xf32, #tpu.memory_space<vmem>>, vector<1x128xf32>
    %c2 = arith.constant 2 : index
    %c0_4 = arith.constant 0 : index
    %4 = vector.load %arg2[%c2, %c0_4] : memref<3x128xf32, #tpu.memory_space<vmem>>, vector<1x128xf32>
    %cst = arith.constant 2.000000e+00 : f32
    %5 = vector.broadcast %cst : f32 to vector<1x128xf32>
    %6 = arith.mulf %5, %2 : vector<1x128xf32>
    %cst_5 = arith.constant 1.000000e+00 : f32
    %7 = vector.broadcast %cst_5 : f32 to vector<1x128xf32>
    %8 = arith.addf %6, %7 : vector<1x128xf32>
    %cst_6 = arith.constant 2.000000e+00 : f32
    %9 = vector.broadcast %cst_6 : f32 to vector<1x128xf32>
    %10 = arith.mulf %9, %3 : vector<1x128xf32>
    %cst_7 = arith.constant 1.000000e+00 : f32
    %11 = vector.broadcast %cst_7 : f32 to vector<1x128xf32>
    %12 = arith.addf %10, %11 : vector<1x128xf32>
    %13 = arith.mulf %8, %12 : vector<1x128xf32>
    %14 = arith.mulf %4, %4 : vector<1x128xf32>
    %15 = arith.subf %13, %14 : vector<1x128xf32>
    %16 = math.rsqrt %15 : vector<1x128xf32>
    %17 = arith.mulf %15, %16 : vector<1x128xf32>
    %cst_8 = arith.constant 1.000000e+00 : f32
    %18 = vector.broadcast %cst_8 : f32 to vector<1x128xf32>
    %19 = arith.subf %17, %18 : vector<1x128xf32>
    %20 = vector.broadcast %1 : f32 to vector<1x128xf32>
    %21 = arith.mulf %20, %19 : vector<1x128xf32>
    %22 = vector.broadcast %0 : f32 to vector<1x128xf32>
    %23 = arith.mulf %22, %16 : vector<1x128xf32>
    %24 = arith.subf %21, %23 : vector<1x128xf32>
    %25 = arith.mulf %24, %16 : vector<1x128xf32>
    %26 = arith.mulf %25, %12 : vector<1x128xf32>
    %27 = vector.broadcast %0 : f32 to vector<1x128xf32>
    %28 = arith.addf %27, %26 : vector<1x128xf32>
    %c0_9 = arith.constant 0 : index
    %c0_10 = arith.constant 0 : index
    %29 = vector.load %arg3[%c0_9, %c0_10] : memref<3x128xf32, #tpu.memory_space<vmem>>, vector<1x128xf32>
    tpu.vector_store %arg3[%c0_9, %c0_10], %28 {strides = array<i32>} : memref<3x128xf32, #tpu.memory_space<vmem>>, vector<1x128xf32>,
    %30 = arith.mulf %25, %8 : vector<1x128xf32>
    %31 = vector.broadcast %0 : f32 to vector<1x128xf32>
    %32 = arith.addf %31, %30 : vector<1x128xf32>
    %c1_11 = arith.constant 1 : index
    %c0_12 = arith.constant 0 : index
    %33 = vector.load %arg3[%c1_11, %c0_12] : memref<3x128xf32, #tpu.memory_space<vmem>>, vector<1x128xf32>
    tpu.vector_store %arg3[%c1_11, %c0_12], %32 {strides = array<i32>} : memref<3x128xf32, #tpu.memory_space<vmem>>, vector<1x128xf32>,
    %cst_13 = arith.constant 0.000000e+00 : f32
    %34 = vector.broadcast %cst_13 : f32 to vector<1x128xf32>
    %35 = arith.subf %34, %25 : vector<1x128xf32>
    %36 = arith.mulf %35, %4 : vector<1x128xf32>
    %c2_14 = arith.constant 2 : index
    %c0_15 = arith.constant 0 : index
    %37 = vector.load %arg3[%c2_14, %c0_15] : memref<3x128xf32, #tpu.memory_space<vmem>>, vector<1x128xf32>
    tpu.vector_store %arg3[%c2_14, %c0_15], %36 {strides = array<i32>} : memref<3x128xf32, #tpu.memory_space<vmem>>, vector<1x128xf32>,
    return
  }
  func.func @transform_0(%arg0: i32) -> i32 {
    %c0_i32 = arith.constant 0 : i32
    %c0_i32_0 = arith.constant 0 : i32
    return %c0_i32 : i32
  }
  func.func @transform_1(%arg0: i32) -> (i32, i32) {
    %c0_i32 = arith.constant 0 : i32
    %c0_i32_0 = arith.constant 0 : i32
    return %c0_i32, %arg0 : i32, i32
  }
  func.func @transform_2(%arg0: i32) -> (i32, i32) {
    %c0_i32 = arith.constant 0 : i32
    %c0_i32_0 = arith.constant 0 : i32
    return %c0_i32, %arg0 : i32, i32
  }
}

</mosaic_0001>

<llo_original>
// kernel: stress_predictor_forward.1
$region0: #{stress_predictor_forward.1}
  #allocation0 [shape = 'u32[]', space=smem, size = 0x4, offset = 0x4, fixed_abs, tag = 'smem constant byte address 0x4 - core index']
  #allocation1 [shape = 'u32[144,128]{1,0:T(1,128)}', space=vmem, size = 0x12000, scoped, tag = 'internal scratch']
  %s0 = inlined_call_operand.vmem [shape: f32[2], index: 0, kind: input, shape index: {}]
  %s1 = inlined_call_operand.vmem [shape: f32[3,128], index: 1, kind: input, shape index: {}, may-alias: {1,2}]
  %s2 = inlined_call_operand.vmem [shape: f32[3,128], index: 2, kind: output, shape index: {}, may-alias: {1,2}]
  %s3 = sld [smem:[#allocation0]]
  $region22: #{stress_predictor_forward.1} parent=0
    _
  %s5 = ssub.s32 1, %s3
  %s6 = scalar_select 0, %s5, %s3
  $region1: #{stress_predictor_forward.1} parent=0
    #allocation2 [shape = 'u8[512]{0}', space=smem, size = 0x200, scoped, tag = 'input window, operand 0, single buffered']
    #allocation3 [shape = 's32[1]{0}', space=sflag, size = 0x4, scoped, tag = 'scoped memory for stress_predictor_forward.1']
    %7 = vsyncpa [#allocation3], 0
    // Predicated region
    $region2: #{stress_predictor_forward.1} parent=1 // pred_check
      _
    $region3: #{stress_predictor_forward.1} parent=1 // pred_check_branch
      %9 = sbr.rel (0) target = $region5
    $region4: #{stress_predictor_forward.1} parent=1 // pred_region
      %s11 = ssub.s32 16, 16
      %12 = vsyncadd [#allocation3], %s11
      %s14 = sshll.u32 %s0, 4
      %s15 = int_to_ptr.vmem [resolvable:$true] %s14
      %17 = dma.vmem_to_smem %s15, 16, [#allocation2], [#allocation3]
    $region5: #{stress_predictor_forward.1} parent=1 // pred_fallthru
      _
    // Predicated region
    $region6: #{stress_predictor_forward.1} parent=1 // pred_check
      _
    $region7: #{stress_predictor_forward.1} parent=1 // pred_check_branch
      %19 = sbr.rel (0) target = $region9
    $region8: #{stress_predictor_forward.1} parent=1 // pred_region
      _
    $region9: #{stress_predictor_forward.1} parent=1 // pred_fallthru
      _
    // Predicated region
    $region10: #{stress_predictor_forward.1} parent=1 // pred_check
      _
    $region11: #{stress_predictor_forward.1} parent=1 // pred_check_branch
      %21 = sbr.rel (0) target = $region13
    $region12: #{stress_predictor_forward.1} parent=1 // pred_region
      %22 = dma.done [#allocation3], 16
    $region13: #{stress_predictor_forward.1} parent=1 // pred_fallthru
      _
    %23 = sfence
    %s24 = sld [smem:[#allocation2]]
    %s25 = sld [smem:[#allocation2 + $0x1]]
    %v26 = vld [vmem:[%s1] sm:$0x1]
    %v27 = vld [vmem:[%s1 + $0x1] sm:$0x1]
    %v28 = vld [vmem:[%s1 + $0x2] sm:$0x1]
    %v29 = vmul.f32 %v26, 2.0
    %v30 = vadd.f32 %v29, 1.0
    %v31 = vmul.f32 %v27, 2.0
    %v32 = vadd.f32 %v31, 1.0
    %v33 = vmul.f32 %v30, %v32
    %v34 = vmul.f32 %v28, %v28
    %v35 = vsub.f32 %v33, %v34
    %v36 = vrsqrt.pop %v35
    %v37 = vmul.f32 %v35, %v36
    %v38 = vsub.f32 %v37, 1.0
    %v39 = vstv %s25
    %v40 = vmul.f32 %v39, %v38
    %v41 = vstv %s24
    %v42 = vmul.f32 %v41, %v36
    %v43 = vsub.f32 %v40, %v42
    %v44 = vmul.f32 %v43, %v36
    %v45 = vmul.f32 %v44, %v32
    %v46 = vadd.f32 %v41, %v45
    %47 = vst [vmem:[%s2] sm:$0x1] %v46
    %v48 = vmul.f32 %v44, %v30
    %v49 = vadd.f32 %v41, %v48
    %50 = vst [vmem:[%s2 + $0x1] sm:$0x1] %v49
    %v51 = vsub.f32 0.0, %v44
    %v52 = vmul.f32 %v51, %v28
    %53 = vst [vmem:[%s2 + $0x2] sm:$0x1] %v52
    // Predicated region
    $region14: #{stress_predictor_forward.1} parent=1 // pred_check
      _
    $region15: #{stress_predictor_forward.1} parent=1 // pred_check_branch
      %55 = sbr.rel (0) target = $region17
    $region16: #{stress_predictor_forward.1} parent=1 // pred_region
      _
    $region17: #{stress_predictor_forward.1} parent=1 // pred_fallthru
      _
    // Predicated region
    $region18: #{stress_predictor_forward.1} parent=1 // pred_check
      _
    $region19: #{stress_predictor_forward.1} parent=1 // pred_check_branch
      %57 = sbr.rel (0) target = $region21
    $region20: #{stress_predictor_forward.1} parent=1 // pred_region
      _
    $region21: #{stress_predictor_forward.1} parent=1 // pred_fallthru
      _
    %58 = vsyncpa [#allocation3], 1

</llo_original>
